<compile_context>
chip_gen: v7x
topology: tpu7x:2x2x1
jax: 0.10.0
libtpu: 0.0.40
codegen_flags: <defaults>
</compile_context>

<pallas_src>
import jax
import jax.numpy as jnp
import numpy as np
from jax.experimental import pallas as pl
from jax.experimental.pallas import tpu as pltpu


# ---------------------------------------------------------------------------
# Fused SE kernel: pool(H,W) -> fc1 -> ReLU -> fc2 -> HSigmoid -> mask * x
# Block layout: x block is (1, tile_t, H, W*C); lane dim = W*C (dense).
# ---------------------------------------------------------------------------
def se3d_kernel(x_ref, w1_ref, b1_ref, w2_ref, b2_ref, fold_ref, unfold_ref, o_ref):
    x = x_ref[0]                                            # (Tt, H, W*C)

    # adaptive avg pool over (H, W):
    #   sublane reduce over H, then fold the W groups out of the lane dim with a
    #   tiny matmul whose entries are 1/(H*W)  -> (Tt, C)
    s_h = jnp.sum(x, axis=1)                                # (Tt, W*C)
    pooled = jnp.dot(s_h, fold_ref[...],
                     preferred_element_type=jnp.float32)    # (Tt, C)

    # fc: 1x1x1 conv (+bias) -> ReLU -> 1x1x1 conv (+bias) -> HSigmoid
    z = jnp.dot(pooled, w1_ref[...],
                preferred_element_type=jnp.float32) + b1_ref[...]
    z = jnp.maximum(z, 0.0)
    s = jnp.dot(z, w2_ref[...],
                preferred_element_type=jnp.float32) + b2_ref[...]
    mask = jnp.clip(s + 3.0, 0.0, 6.0) * (1.0 / 6.0)        # HSigmoid, (Tt, C)

    # broadcast the per-(t, c) mask back over the folded (W, C) lane dim and H
    mask_wc = jnp.dot(mask, unfold_ref[...],
                      preferred_element_type=jnp.float32)   # (Tt, W*C)
    o_ref[0] = x * mask_wc[:, None, :]                      # (Tt, H, W*C)


# ---------------------------------------------------------------------------
# Wrapper
# ---------------------------------------------------------------------------
def _pick_tile_t(N, T, target_steps=8):
    """Largest divisor of T that still yields >= target_steps pipeline steps."""
    for tt in range(T, 0, -1):
        if T % tt == 0 and N * (T // tt) >= target_steps:
            return tt
    return 1


def se_layer_3d(x_ncdhw, params):
    """x_ncdhw: (N, C, T, H, W) float32. params: w_se1 (C,R), b_se1 (1,R),
    w_se2 (R,C), b_se2 (1,C)."""
    N, C, T, H, W = x_ncdhw.shape
    R = params["w_se1"].shape[1]
    WC = W * C

    # channel-last, then fold (W, C) into a dense lane axis of width W*C
    x = jnp.transpose(x_ncdhw, (0, 2, 3, 4, 1)).astype(jnp.float32)  # (N,T,H,W,C)
    x_f = x.reshape(N, T, H, WC)

    tile_t = _pick_tile_t(N, T)

    # fold / unfold matrices for the lane-folded (W, C) axis
    eye = jnp.eye(C, dtype=jnp.float32)
    unfold = jnp.tile(eye, (1, W))                 # (C, W*C): unfold[c, w*C+c] = 1
    fold = unfold.T * (1.0 / (H * W))              # (W*C, C): avg-pool weights

    out_f = pl.pallas_call(
        se3d_kernel,
        out_shape=jax.ShapeDtypeStruct((N, T, H, WC), jnp.float32),
        grid=(N, T // tile_t),
        in_specs=[
            pl.BlockSpec((1, tile_t, H, WC), lambda n, t: (n, t, 0, 0)),
            pl.BlockSpec((C, R), lambda n, t: (0, 0)),
            pl.BlockSpec((1, R), lambda n, t: (0, 0)),
            pl.BlockSpec((R, C), lambda n, t: (0, 0)),
            pl.BlockSpec((1, C), lambda n, t: (0, 0)),
            pl.BlockSpec((WC, C), lambda n, t: (0, 0)),
            pl.BlockSpec((C, WC), lambda n, t: (0, 0)),
        ],
        out_specs=pl.BlockSpec((1, tile_t, H, WC), lambda n, t: (n, t, 0, 0)),
        compiler_params=pltpu.CompilerParams(
            dimension_semantics=("parallel", "parallel")),
    )(x_f, params["w_se1"], params["b_se1"], params["w_se2"], params["b_se2"],
      fold, unfold)

    out = out_f.reshape(N, T, H, W, C)
    return jnp.transpose(out, (0, 4, 1, 2, 3))     # back to NCDHW


# ---------------------------------------------------------------------------
# Pure-JAX reference (same math, no Pallas) for correctness checking
# ---------------------------------------------------------------------------
def reference(x_ncdhw, w1, b1, w2, b2):
    x = x_ncdhw.astype(jnp.float32)                           # (N, C, T, H, W)
    pooled = x.mean(axis=(3, 4))                              # (N, C, T)
    z = jnp.einsum("nct,cr->nrt", pooled, w1) + b1[0][None, :, None]
    z = jnp.maximum(z, 0.0)
    s = jnp.einsum("nrt,rc->nct", z, w2) + b2[0][None, :, None]
    mask = jnp.clip(s + 3.0, 0.0, 6.0) / 6.0                  # HSigmoid
    return x * mask[:, :, :, None, None]


# ---------------------------------------------------------------------------
if __name__ == "__main__":
    N, C, T, H, W = 2, 16, 8, 8, 8          # W * C = 128 -> dense lane dim
    reduction = 4
    R = C // reduction

    key = jax.random.PRNGKey(0)
    kx, k1, k2, k3, k4 = jax.random.split(key, 5)

    x = jax.random.normal(kx, (N, C, T, H, W), dtype=jnp.float32)
    params = {
        "w_se1": (0.1 * jax.random.normal(k1, (C, R))).astype(jnp.float32),
        "b_se1": (0.1 * jax.random.normal(k2, (1, R))).astype(jnp.float32),
        "w_se2": (0.1 * jax.random.normal(k3, (R, C))).astype(jnp.float32),
        "b_se2": (0.1 * jax.random.normal(k4, (1, C))).astype(jnp.float32),
    }

    out = jax.block_until_ready(se_layer_3d(x, params))
    ref = jax.block_until_ready(
        reference(x, params["w_se1"], params["b_se1"],
                  params["w_se2"], params["b_se2"]))

    assert out.shape == (N, C, T, H, W)
    np.testing.assert_allclose(np.asarray(out), np.asarray(ref),
                               rtol=1e-4, atol=1e-5)
    print("KERNEL_OK")
</pallas_src>

<mosaic_0001>
module attributes {stable_mosaic.version = 11 : i64} {
  func.func @se3d_kernel(%arg0: i32, %arg1: i32, %arg2: memref<1x2x8x128xf32, #tpu.memory_space<vmem>>, %arg3: memref<16x4xf32, #tpu.memory_space<vmem>>, %arg4: memref<1x4xf32, #tpu.memory_space<vmem>>, %arg5: memref<4x16xf32, #tpu.memory_space<vmem>>, %arg6: memref<1x16xf32, #tpu.memory_space<vmem>>, %arg7: memref<128x16xf32, #tpu.memory_space<vmem>>, %arg8: memref<16x128xf32, #tpu.memory_space<vmem>>, %arg9: memref<1x2x8x128xf32, #tpu.memory_space<vmem>>) attributes {dimension_semantics = [#tpu.dimension_semantics<parallel>, #tpu.dimension_semantics<parallel>], iteration_bounds = array<i64: 2, 4>, scalar_prefetch = 0 : i64, scratch_operands = 0 : i64, tpu.core_type = #tpu.core_type<tc>, window_params = [{transform_indices = @transform_0, window_bounds = array<i64: 1, 2, 8, 128>}, {pipeline_mode = #tpu.pipeline_mode<synchronous>, transform_indices = @transform_1, window_bounds = array<i64: 16, 4>}, {pipeline_mode = #tpu.pipeline_mode<synchronous>, transform_indices = @transform_2, window_bounds = array<i64: 1, 4>}, {pipeline_mode = #tpu.pipeline_mode<synchronous>, transform_indices = @transform_3, window_bounds = array<i64: 4, 16>}, {pipeline_mode = #tpu.pipeline_mode<synchronous>, transform_indices = @transform_4, window_bounds = array<i64: 1, 16>}, {pipeline_mode = #tpu.pipeline_mode<synchronous>, transform_indices = @transform_5, window_bounds = array<i64: 128, 16>}, {pipeline_mode = #tpu.pipeline_mode<synchronous>, transform_indices = @transform_6, window_bounds = array<i64: 16, 128>}, {transform_indices = @transform_7, window_bounds = array<i64: 1, 2, 8, 128>}]} {
    %c0 = arith.constant 0 : index
    %c0_0 = arith.constant 0 : index
    %c0_1 = arith.constant 0 : index
    %c0_2 = arith.constant 0 : index
    %0 = vector.load %arg2[%c0, %c0_0, %c0_1, %c0_2] : memref<1x2x8x128xf32, #tpu.memory_space<vmem>>, vector<1x2x8x128xf32>
    %1 = vector.shape_cast %0 : vector<1x2x8x128xf32> to vector<2x8x128xf32>
    %cst = arith.constant dense<0.000000e+00> : vector<2x128xf32>
    %2 = vector.multi_reduction <add>, %1, %cst [1] : vector<2x8x128xf32> to vector<2x128xf32>
    %c0_3 = arith.constant 0 : index
    %c0_4 = arith.constant 0 : index
    %3 = vector.load %arg7[%c0_3, %c0_4] : memref<128x16xf32, #tpu.memory_space<vmem>>, vector<128x16xf32>
    %cst_5 = arith.constant dense<0.000000e+00> : vector<2x16xf32>
    %4 = tpu.matmul %2, %3, %cst_5 {dimension_numbers = #tpu.dot_dimension_numbers<[1], [0], [0], [1], [0, 0, 1, 1], [], []>} : vector<2x128xf32>, vector<128x16xf32>, vector<2x16xf32> -> vector<2x16xf32>
    %c0_6 = arith.constant 0 : index
    %c0_7 = arith.constant 0 : index
    %5 = vector.load %arg3[%c0_6, %c0_7] : memref<16x4xf32, #tpu.memory_space<vmem>>, vector<16x4xf32>
    %cst_8 = arith.constant dense<0.000000e+00> : vector<2x4xf32>
    %6 = tpu.matmul %4, %5, %cst_8 {dimension_numbers = #tpu.dot_dimension_numbers<[1], [0], [0], [1], [0, 0, 1, 1], [], []>} : vector<2x16xf32>, vector<16x4xf32>, vector<2x4xf32> -> vector<2x4xf32>
    %c0_9 = arith.constant 0 : index
    %c0_10 = arith.constant 0 : index
    %7 = vector.load %arg4[%c0_9, %c0_10] : memref<1x4xf32, #tpu.memory_space<vmem>>, vector<1x4xf32>
    %8 = vector.broadcast %7 : vector<1x4xf32> to vector<2x4xf32>
    %9 = arith.addf %6, %8 : vector<2x4xf32>
    %cst_11 = arith.constant 0.000000e+00 : f32
    %10 = vector.broadcast %cst_11 : f32 to vector<2x4xf32>
    %11 = arith.maximumf %9, %10 : vector<2x4xf32>
    %c0_12 = arith.constant 0 : index
    %c0_13 = arith.constant 0 : index
    %12 = vector.load %arg5[%c0_12, %c0_13] : memref<4x16xf32, #tpu.memory_space<vmem>>, vector<4x16xf32>
    %cst_14 = arith.constant dense<0.000000e+00> : vector<2x16xf32>
    %13 = tpu.matmul %11, %12, %cst_14 {dimension_numbers = #tpu.dot_dimension_numbers<[1], [0], [0], [1], [0, 0, 1, 1], [], []>} : vector<2x4xf32>, vector<4x16xf32>, vector<2x16xf32> -> vector<2x16xf32>
    %c0_15 = arith.constant 0 : index
    %c0_16 = arith.constant 0 : index
    %14 = vector.load %arg6[%c0_15, %c0_16] : memref<1x16xf32, #tpu.memory_space<vmem>>, vector<1x16xf32>
    %15 = vector.broadcast %14 : vector<1x16xf32> to vector<2x16xf32>
    %16 = arith.addf %13, %15 : vector<2x16xf32>
    %cst_17 = arith.constant 3.000000e+00 : f32
    %17 = vector.broadcast %cst_17 : f32 to vector<2x16xf32>
    %18 = arith.addf %16, %17 : vector<2x16xf32>
    %cst_18 = arith.constant 0.000000e+00 : f32
    %cst_19 = arith.constant 6.000000e+00 : f32
    %19 = vector.broadcast %cst_18 : f32 to vector<2x16xf32>
    %20 = arith.maximumf %19, %18 : vector<2x16xf32>
    %21 = vector.broadcast %cst_19 : f32 to vector<2x16xf32>
    %22 = arith.minimumf %21, %20 : vector<2x16xf32>
    %cst_20 = arith.constant 0.166666672 : f32
    %23 = vector.broadcast %cst_20 : f32 to vector<2x16xf32>
    %24 = arith.mulf %22, %23 : vector<2x16xf32>
    %c0_21 = arith.constant 0 : index
    %c0_22 = arith.constant 0 : index
    %25 = vector.load %arg8[%c0_21, %c0_22] : memref<16x128xf32, #tpu.memory_space<vmem>>, vector<16x128xf32>
    %cst_23 = arith.constant dense<0.000000e+00> : vector<2x128xf32>
    %26 = tpu.matmul %24, %25, %cst_23 {dimension_numbers = #tpu.dot_dimension_numbers<[1], [0], [0], [1], [0, 0, 1, 1], [], []>} : vector<2x16xf32>, vector<16x128xf32>, vector<2x128xf32> -> vector<2x128xf32>
    %27 = vector.shape_cast %26 : vector<2x128xf32> to vector<2x1x128xf32>
    %28 = vector.broadcast %27 : vector<2x1x128xf32> to vector<2x8x128xf32>
    %29 = arith.mulf %1, %28 : vector<2x8x128xf32>
    %c0_24 = arith.constant 0 : index
    %c0_25 = arith.constant 0 : index
    %c0_26 = arith.constant 0 : index
    %c0_27 = arith.constant 0 : index
    %30 = vector.load %arg9[%c0_24, %c0_25, %c0_26, %c0_27] : memref<1x2x8x128xf32, #tpu.memory_space<vmem>>, vector<1x2x8x128xf32>
    %31 = vector.shape_cast %30 : vector<1x2x8x128xf32> to vector<2x8x128xf32>
    %32 = vector.shape_cast %29 : vector<2x8x128xf32> to vector<1x2x8x128xf32>
    tpu.vector_store %arg9[%c0_24, %c0_25, %c0_26, %c0_27], %32 {strides = array<i32>} : memref<1x2x8x128xf32, #tpu.memory_space<vmem>>, vector<1x2x8x128xf32>,
    return
  }
  func.func @transform_0(%arg0: i32, %arg1: i32) -> (i32, i32, i32, i32) {
    %c0_i32 = arith.constant 0 : i32
    %c0_i32_0 = arith.constant 0 : i32
    %c0_i32_1 = arith.constant 0 : i32
    return %arg0, %arg1, %c0_i32, %c0_i32_0 : i32, i32, i32, i32
  }
  func.func @transform_1(%arg0: i32, %arg1: i32) -> (i32, i32) {
    %c0_i32 = arith.constant 0 : i32
    %c0_i32_0 = arith.constant 0 : i32
    %c0_i32_1 = arith.constant 0 : i32
    return %c0_i32, %c0_i32_0 : i32, i32
  }
  func.func @transform_2(%arg0: i32, %arg1: i32) -> (i32, i32) {
    %c0_i32 = arith.constant 0 : i32
    %c0_i32_0 = arith.constant 0 : i32
    %c0_i32_1 = arith.constant 0 : i32
    return %c0_i32, %c0_i32_0 : i32, i32
  }
  func.func @transform_3(%arg0: i32, %arg1: i32) -> (i32, i32) {
    %c0_i32 = arith.constant 0 : i32
    %c0_i32_0 = arith.constant 0 : i32
    %c0_i32_1 = arith.constant 0 : i32
    return %c0_i32, %c0_i32_0 : i32, i32
  }
  func.func @transform_4(%arg0: i32, %arg1: i32) -> (i32, i32) {
    %c0_i32 = arith.constant 0 : i32
    %c0_i32_0 = arith.constant 0 : i32
    %c0_i32_1 = arith.constant 0 : i32
    return %c0_i32, %c0_i32_0 : i32, i32
  }
  func.func @transform_5(%arg0: i32, %arg1: i32) -> (i32, i32) {
    %c0_i32 = arith.constant 0 : i32
    %c0_i32_0 = arith.constant 0 : i32
    %c0_i32_1 = arith.constant 0 : i32
    return %c0_i32, %c0_i32_0 : i32, i32
  }
  func.func @transform_6(%arg0: i32, %arg1: i32) -> (i32, i32) {
    %c0_i32 = arith.constant 0 : i32
    %c0_i32_0 = arith.constant 0 : i32
    %c0_i32_1 = arith.constant 0 : i32
    return %c0_i32, %c0_i32_0 : i32, i32
  }
  func.func @transform_7(%arg0: i32, %arg1: i32) -> (i32, i32, i32, i32) {
    %c0_i32 = arith.constant 0 : i32
    %c0_i32_0 = arith.constant 0 : i32
    %c0_i32_1 = arith.constant 0 : i32
    return %arg0, %arg1, %c0_i32, %c0_i32_0 : i32, i32, i32, i32
  }
}

</mosaic_0001>

<llo_original>
// kernel: tpu_custom_call.1
$region0: #{tpu_custom_call.1}
  #allocation0 [shape = 'u32[]', space=smem, size = 0x4, offset = 0x4, fixed_abs, tag = 'smem constant byte address 0x4 - core index']
  #allocation1 [shape = 'u32[144,128]{1,0:T(1,128)}', space=vmem, size = 0x12000, scoped, tag = 'internal scratch']
  %s0 = inlined_call_operand.vmem [shape: f32[2,8,8,128], index: 0, kind: input, shape index: {}]
  %s1 = inlined_call_operand.vmem [shape: f32[16,4], index: 1, kind: input, shape index: {}]
  %s2 = inlined_call_operand.vmem [shape: f32[1,4], index: 2, kind: input, shape index: {}]
  %s3 = inlined_call_operand.vmem [shape: f32[4,16], index: 3, kind: input, shape index: {}]
  %s4 = inlined_call_operand.vmem [shape: f32[1,16], index: 4, kind: input, shape index: {}]
  %s5 = inlined_call_operand.vmem [shape: f32[128,16], index: 5, kind: input, shape index: {}]
  %s6 = inlined_call_operand.vmem [shape: f32[16,128], index: 6, kind: input, shape index: {}]
  %s7 = inlined_call_operand.hbm [shape: f32[2,8,8,128], index: 7, kind: output, shape index: {}]
  %s8 = sld [smem:[#allocation0]]
  $region61: #{tpu_custom_call.1} parent=0
    _
  %s10 = ssub.s32 1, %s8
  %s11 = scalar_select 0, %s10, %s8
  $region1: #{tpu_custom_call.1} parent=0
    #allocation2 [shape = 'u8[16384]{0}', space=vmem, size = 0x4000, scoped, tag = 'output window, operand 0']
    #allocation3 [shape = 's32[2]{0}', space=sflag, size = 0x8, scoped, tag = 'scoped memory for tpu_custom_call.1']
    %12 = vsyncpa [#allocation3], 0
    %s13 = scalar_lea.sflag [#allocation3], 1
    %14 = vsyncpa %s13, 0
    loop: start=0, step=1, limit=10
    $region2: #{tpu_custom_call.1} parent=1 // loop_pre_header
      _
    $region3: #{tpu_custom_call.1} parent=1 // loop_header
      %s16 = sphi 0, %s20
      %p17 = scmp.ge.s32.totalorder %s16, 10
      %s23 = sphi 0, %s35
      %s24 = sphi 0, %s31
      %s25 = sphi 0, %s23
      %s26 = sphi 0, %s24
      %s27 = sphi 0, %s25
      %s28 = sphi 0, %s26
      %s40 = sphi 0, %s42
      %s43 = sphi 0, %s40
      %s44 = sphi 0, %s43
      %s60 = sphi 0, %s44
      %s64 = sphi 0, %s64
      %s66 = sphi 0, %s64
      %s67 = sphi 0, %s66
      %s81 = sphi 0, %s67
      %s85 = sphi 0, %s85
      %s87 = sphi 0, %s85
      %s88 = sphi 0, %s87
      %s102 = sphi 0, %s88
      %s106 = sphi 0, %s106
      %s108 = sphi 0, %s106
      %s109 = sphi 0, %s108
      %s123 = sphi 0, %s109
      %s127 = sphi 0, %s127
      %s129 = sphi 0, %s127
      %s130 = sphi 0, %s129
      %s144 = sphi 0, %s130
      %s148 = sphi 0, %s148
      %s150 = sphi 0, %s148
      %s151 = sphi 0, %s150
      %s165 = sphi 0, %s151
      %s169 = sphi 0, %s169
      %s171 = sphi 0, %s169
      %s172 = sphi 0, %s171
      %s186 = sphi 0, %s172
      %s194 = sphi 0, %s196
      %s197 = sphi 0, %s194
      %s198 = sphi 0, %s197
      %s214 = sphi 0, %s198
    $region4: #{tpu_custom_call.1} parent=1 // loop_header_branch
      %19 = sbr.rel (%p17) target = $region8
    $region5: #{tpu_custom_call.1} parent=1 // loop_body
      %s21 = ssub.s32 %s16, 1
      %s22 = ssub.s32 %s16, 2
      %s29 = sadd.s32 1, %s24
      %p30 = scmp.ge.s32.totalorder %s29, 4
      %s31 = scalar_select %p30, 0, %s29
      %s32 = sadd.s32 1, %s23
      %s33 = scalar_select %p30, %s32, %s23
      %p34 = scmp.ge.s32.totalorder %s33, 2
      %s35 = scalar_select %p34, 0, %s33
      %s36 = ssub.s32 %s23, %s35
      %s37 = ssub.s32 %s24, %s31
      %s38 = sor.u32 %s36, %s37
      %p39 = scmp.eq.s32.totalorder %s38, 0
      %s41 = sadd.s32 %s40, 1
      %s42 = scalar_select %p39, %s40, %s41
      %p45 = pneg %p39
      %p46 = scmp.eq.s32.totalorder %s16, 7
      %p47 = por %p45, %p46
      %p48 = scmp.ne.s32.totalorder %s40, %s43
      %p49 = scmp.eq.s32.totalorder %s16, 0
      %p50 = por %p48, %p49
      %p51 = scmp.ne.s32.totalorder %s40, %s43
      %p52 = scmp.eq.s32.totalorder %s21, 7
      %p53 = por %p51, %p52
      %p54 = scmp.ne.s32.totalorder %s43, %s44
      %p55 = scmp.eq.s32.totalorder %s21, 0
      %p56 = por %p54, %p55
      %p57 = scmp.ne.s32.totalorder %s43, %s44
      %p58 = scmp.eq.s32.totalorder %s22, 7
      %p59 = por %p57, %p58
      %p61 = scmp.ne.s32.totalorder %s44, %s60
      %p62 = scmp.eq.s32.totalorder %s22, 0
      %p63 = por %p61, %p62
      %s65 = sadd.s32 %s64, 1
      %p68 = scmp.eq.s32.totalorder %s16, 7
      %p69 = scmp.ne.s32.totalorder %s64, %s66
      %p70 = scmp.eq.s32.totalorder %s16, 0
      %p71 = por %p69, %p70
      %p72 = scmp.ne.s32.totalorder %s64, %s66
      %p73 = scmp.eq.s32.totalorder %s21, 7
      %p74 = por %p72, %p73
      %p75 = scmp.ne.s32.totalorder %s66, %s67
      %p76 = scmp.eq.s32.totalorder %s21, 0
      %p77 = por %p75, %p76
      %p78 = scmp.ne.s32.totalorder %s66, %s67
      %p79 = scmp.eq.s32.totalorder %s22, 7
      %p80 = por %p78, %p79
      %p82 = scmp.ne.s32.totalorder %s67, %s81
      %p83 = scmp.eq.s32.totalorder %s22, 0
      %p84 = por %p82, %p83
      %s86 = sadd.s32 %s85, 1
      %p89 = scmp.eq.s32.totalorder %s16, 7
      %p90 = scmp.ne.s32.totalorder %s85, %s87
      %p91 = scmp.eq.s32.totalorder %s16, 0
      %p92 = por %p90, %p91
      %p93 = scmp.ne.s32.totalorder %s85, %s87
      %p94 = scmp.eq.s32.totalorder %s21, 7
      %p95 = por %p93, %p94
      %p96 = scmp.ne.s32.totalorder %s87, %s88
      %p97 = scmp.eq.s32.totalorder %s21, 0
      %p98 = por %p96, %p97
      %p99 = scmp.ne.s32.totalorder %s87, %s88
      %p100 = scmp.eq.s32.totalorder %s22, 7
      %p101 = por %p99, %p100
      %p103 = scmp.ne.s32.totalorder %s88, %s102
      %p104 = scmp.eq.s32.totalorder %s22, 0
      %p105 = por %p103, %p104
      %s107 = sadd.s32 %s106, 1
      %p110 = scmp.eq.s32.totalorder %s16, 7
      %p111 = scmp.ne.s32.totalorder %s106, %s108
      %p112 = scmp.eq.s32.totalorder %s16, 0
      %p113 = por %p111, %p112
      %p114 = scmp.ne.s32.totalorder %s106, %s108
      %p115 = scmp.eq.s32.totalorder %s21, 7
      %p116 = por %p114, %p115
      %p117 = scmp.ne.s32.totalorder %s108, %s109
      %p118 = scmp.eq.s32.totalorder %s21, 0
      %p119 = por %p117, %p118
      %p120 = scmp.ne.s32.totalorder %s108, %s109
      %p121 = scmp.eq.s32.totalorder %s22, 7
      %p122 = por %p120, %p121
      %p124 = scmp.ne.s32.totalorder %s109, %s123
      %p125 = scmp.eq.s32.totalorder %s22, 0
      %p126 = por %p124, %p125
      %s128 = sadd.s32 %s127, 1
      %p131 = scmp.eq.s32.totalorder %s16, 7
      %p132 = scmp.ne.s32.totalorder %s127, %s129
      %p133 = scmp.eq.s32.totalorder %s16, 0
      %p134 = por %p132, %p133
      %p135 = scmp.ne.s32.totalorder %s127, %s129
      %p136 = scmp.eq.s32.totalorder %s21, 7
      %p137 = por %p135, %p136
      %p138 = scmp.ne.s32.totalorder %s129, %s130
      %p139 = scmp.eq.s32.totalorder %s21, 0
      %p140 = por %p138, %p139
      %p141 = scmp.ne.s32.totalorder %s129, %s130
      %p142 = scmp.eq.s32.totalorder %s22, 7
      %p143 = por %p141, %p142
      %p145 = scmp.ne.s32.totalorder %s130, %s144
      %p146 = scmp.eq.s32.totalorder %s22, 0
      %p147 = por %p145, %p146
      %s149 = sadd.s32 %s148, 1
      %p152 = scmp.eq.s32.totalorder %s16, 7
      %p153 = scmp.ne.s32.totalorder %s148, %s150
      %p154 = scmp.eq.s32.totalorder %s16, 0
      %p155 = por %p153, %p154
      %p156 = scmp.ne.s32.totalorder %s148, %s150
      %p157 = scmp.eq.s32.totalorder %s21, 7
      %p158 = por %p156, %p157
      %p159 = scmp.ne.s32.totalorder %s150, %s151
      %p160 = scmp.eq.s32.totalorder %s21, 0
      %p161 = por %p159, %p160
      %p162 = scmp.ne.s32.totalorder %s150, %s151
      %p163 = scmp.eq.s32.totalorder %s22, 7
      %p164 = por %p162, %p163
      %p166 = scmp.ne.s32.totalorder %s151, %s165
      %p167 = scmp.eq.s32.totalorder %s22, 0
      %p168 = por %p166, %p167
      %s170 = sadd.s32 %s169, 1
      %p173 = scmp.eq.s32.totalorder %s16, 7
      %p174 = scmp.ne.s32.totalorder %s169, %s171
      %p175 = scmp.eq.s32.totalorder %s16, 0
      %p176 = por %p174, %p175
      %p177 = scmp.ne.s32.totalorder %s169, %s171
      %p178 = scmp.eq.s32.totalorder %s21, 7
      %p179 = por %p177, %p178
      %p180 = scmp.ne.s32.totalorder %s171, %s172
      %p181 = scmp.eq.s32.totalorder %s21, 0
      %p182 = por %p180, %p181
      %p183 = scmp.ne.s32.totalorder %s171, %s172
      %p184 = scmp.eq.s32.totalorder %s22, 7
      %p185 = por %p183, %p184
      %p187 = scmp.ne.s32.totalorder %s172, %s186
      %p188 = scmp.eq.s32.totalorder %s22, 0
      %p189 = por %p187, %p188
      %s190 = ssub.s32 %s23, %s35
      %s191 = ssub.s32 %s24, %s31
      %s192 = sor.u32 %s190, %s191
      %p193 = scmp.eq.s32.totalorder %s192, 0
      %s195 = sadd.s32 %s194, 1
      %s196 = scalar_select %p193, %s194, %s195
      %p199 = pneg %p193
      %p200 = scmp.eq.s32.totalorder %s16, 7
      %p201 = por %p199, %p200
      %p202 = scmp.ne.s32.totalorder %s194, %s197
      %p203 = scmp.eq.s32.totalorder %s16, 0
      %p204 = por %p202, %p203
      %p205 = scmp.ne.s32.totalorder %s194, %s197
      %p206 = scmp.eq.s32.totalorder %s21, 7
      %p207 = por %p205, %p206
      %p208 = scmp.ne.s32.totalorder %s197, %s198
      %p209 = scmp.eq.s32.totalorder %s21, 0
      %p210 = por %p208, %p209
      %p211 = scmp.ne.s32.totalorder %s197, %s198
      %p212 = scmp.eq.s32.totalorder %s22, 7
      %p213 = por %p211, %p212
      %p215 = scmp.ne.s32.totalorder %s198, %s214
      %p216 = scmp.eq.s32.totalorder %s22, 0
      %p217 = por %p215, %p216
      %p218 = scmp.le.s32.totalorder 1, %s16
      %p219 = scmp.lt.s32.totalorder %s16, 9
      %p220 = pnand %p218, %p219
      %p221 = pneg %p220
      // Predicated region
      $region9: #{tpu_custom_call.1} parent=5 // pred_check
        _
      $region10: #{tpu_custom_call.1} parent=5 // pred_check_branch
        %223 = sbr.rel (%p220) target = $region12
      $region11: #{tpu_custom_call.1} parent=5 // pred_region
        %s224 = ssub.s32 %s16, 1
        // Predicated region
        $region13: #{tpu_custom_call.1} parent=11 // pred_check
          %p225 = pneg %p77
        $region14: #{tpu_custom_call.1} parent=11 // pred_check_branch
          %227 = sbr.rel (%p225) target = $region16
        $region15: #{tpu_custom_call.1} parent=11 // pred_region
          _
        $region16: #{tpu_custom_call.1} parent=11 // pred_fallthru
          _
        // Predicated region
        $region17: #{tpu_custom_call.1} parent=11 // pred_check
          %p228 = pneg %p98
        $region18: #{tpu_custom_call.1} parent=11 // pred_check_branch
          %230 = sbr.rel (%p228) target = $region20
        $region19: #{tpu_custom_call.1} parent=11 // pred_region
          _
        $region20: #{tpu_custom_call.1} parent=11 // pred_fallthru
          _
        // Predicated region
        $region21: #{tpu_custom_call.1} parent=11 // pred_check
          %p231 = pneg %p119
        $region22: #{tpu_custom_call.1} parent=11 // pred_check_branch
          %233 = sbr.rel (%p231) target = $region24
        $region23: #{tpu_custom_call.1} parent=11 // pred_region
          _
        $region24: #{tpu_custom_call.1} parent=11 // pred_fallthru
          _
        // Predicated region
        $region25: #{tpu_custom_call.1} parent=11 // pred_check
          %p234 = pneg %p140
        $region26: #{tpu_custom_call.1} parent=11 // pred_check_branch
          %236 = sbr.rel (%p234) target = $region28
        $region27: #{tpu_custom_call.1} parent=11 // pred_region
          _
        $region28: #{tpu_custom_call.1} parent=11 // pred_fallthru
          _
        // Predicated region
        $region29: #{tpu_custom_call.1} parent=11 // pred_check
          %p237 = pneg %p161
        $region30: #{tpu_custom_call.1} parent=11 // pred_check_branch
          %239 = sbr.rel (%p237) target = $region32
        $region31: #{tpu_custom_call.1} parent=11 // pred_region
          _
        $region32: #{tpu_custom_call.1} parent=11 // pred_fallthru
          _
        // Predicated region
        $region33: #{tpu_custom_call.1} parent=11 // pred_check
          %p240 = pneg %p182
        $region34: #{tpu_custom_call.1} parent=11 // pred_check_branch
          %242 = sbr.rel (%p240) target = $region36
        $region35: #{tpu_custom_call.1} parent=11 // pred_region
          _
        $region36: #{tpu_custom_call.1} parent=11 // pred_fallthru
          _
      $region12: #{tpu_custom_call.1} parent=5 // pred_fallthru
        _
      %p243 = scmp.lt.s32.totalorder %s16, 8
      // Predicated region
      $region37: #{tpu_custom_call.1} parent=5 // pred_check
        %p244 = pneg %p243
      $region38: #{tpu_custom_call.1} parent=5 // pred_check_branch
        %246 = sbr.rel (%p244) target = $region40
      $region39: #{tpu_custom_call.1} parent=5 // pred_region
        // Predicated region
        $region41: #{tpu_custom_call.1} parent=39 // pred_check
          %p247 = pneg %p50
        $region42: #{tpu_custom_call.1} parent=39 // pred_check_branch
          %249 = sbr.rel (%p247) target = $region44
        $region43: #{tpu_custom_call.1} parent=39 // pred_region
          %s250 = smul.u32 2, %s24
          %p251 = scmp.lt.s32.totalorder %s23, 1
          %s252 = scalar_select %p251, %s23, 1
          %p253 = scmp.lt.s32.totalorder %s250, 7
          %s254 = scalar_select %p253, %s250, 7
          %s255 = smul.addr %s252, 8
          %s256 = sadd.s32 %s254, %s255
          %s257 = smul.addr %s256, 8
          %s258 = scalar_lea.vmem %s0, %s257
          %s259 = smul.u32 2, %s24
        $region44: #{tpu_custom_call.1} parent=39 // pred_fallthru
          _
      $region40: #{tpu_custom_call.1} parent=5 // pred_fallthru
        _
      %p260 = scmp.le.s32.totalorder 1, %s16
      %p261 = scmp.lt.s32.totalorder %s16, 9
      %p262 = pnand %p260, %p261
      %p263 = pneg %p262
      // Predicated region
      $region45: #{tpu_custom_call.1} parent=5 // pred_check
        _
      $region46: #{tpu_custom_call.1} parent=5 // pred_check_branch
        %265 = sbr.rel (%p262) target = $region48
      $region47: #{tpu_custom_call.1} parent=5 // pred_region
        %s266 = ssub.s32 %s16, 1
        %s267 = smul.u32 2, %s26
        %p268 = scmp.lt.s32.totalorder %s25, 1
        %s269 = scalar_select %p268, %s25, 1
        %p270 = scmp.lt.s32.totalorder %s267, 7
        %s271 = scalar_select %p270, %s267, 7
        %s272 = smul.addr %s269, 8
        %s273 = sadd.s32 %s271, %s272
        %s274 = smul.addr %s273, 8
        %s275 = scalar_lea.vmem %s0, %s274
        %p276 = pneg %p56
        %p277 = pneg %p53
        %p278 = pneg %p77
        %p279 = pneg %p74
        %p280 = pneg %p98
        %p281 = pneg %p95
        %p282 = pneg %p119
        %p283 = pneg %p116
        %p284 = pneg %p140
        %p285 = pneg %p137
        %p286 = pneg %p161
        %p287 = pneg %p158
        %p288 = pneg %p182
        %p289 = pneg %p179
        %p290 = pneg %p210
        %p291 = pneg %p207
        %s292 = sand.u32 %s197, 1
        %s293 = scalar_lea.sflag [#allocation3], %s292
        %s294 = sand.u32 %s197, 1
        %s295 = smul.addr %s294, 16
        %s296 = scalar_lea.vmem [#allocation2], %s295
        %s297 = smul.u32 2, %s26
        %p298 = scmp.lt.s32.totalorder %s25, 1
        %s299 = scalar_select %p298, %s25, 1
        %p300 = scmp.lt.s32.totalorder %s297, 7
        %s301 = scalar_select %p300, %s297, 7
        %s302 = smul.addr %s299, 8
        %s303 = sadd.s32 %s301, %s302
        %s304 = smul.addr %s303, 8
        %s305 = scalar_lea.vmem %s0, %s304
        %s306 = smul.u32 2, %s26
        %s307 = smul.u32 2, %s26
        %v308 = vld [vmem:[%s305] sm:$0xff]
        %v309 = vld [vmem:[%s305 + $0x8] sm:$0xff]
        %v310 = vrot.slane %v308, 4
        %v311 = vadd.f32 %v308, %v310
        %v312 = vrot.slane %v311, 2
        %v313 = vadd.f32 %v311, %v312
        %v314 = vrot.slane %v313, 1
        %v315 = vadd.f32 %v313, %v314
        %v316 = vrot.slane %v309, 4
        %v317 = vadd.f32 %v309, %v316
        %v318 = vrot.slane %v317, 2
        %v319 = vadd.f32 %v317, %v318
        %v320 = vrot.slane %v319, 1
        %v321 = vadd.f32 %v319, %v320
        %v322 = vld [vmem:[%s5] sm:$0xff]
        %v323 = vld [vmem:[%s5 + $0x8] sm:$0xff]
        %v324 = vld [vmem:[%s5 + $0x10] sm:$0xff]
        %v325 = vld [vmem:[%s5 + $0x18] sm:$0xff]
        %v326 = vld [vmem:[%s5 + $0x20] sm:$0xff]
        %v327 = vld [vmem:[%s5 + $0x28] sm:$0xff]
        %v328 = vld [vmem:[%s5 + $0x30] sm:$0xff]
        %v329 = vld [vmem:[%s5 + $0x38] sm:$0xff]
        %v330 = vld [vmem:[%s5 + $0x40] sm:$0xff]
        %v331 = vld [vmem:[%s5 + $0x48] sm:$0xff]
        %v332 = vld [vmem:[%s5 + $0x50] sm:$0xff]
        %v333 = vld [vmem:[%s5 + $0x58] sm:$0xff]
        %v334 = vld [vmem:[%s5 + $0x60] sm:$0xff]
        %v335 = vld [vmem:[%s5 + $0x68] sm:$0xff]
        %v336 = vld [vmem:[%s5 + $0x70] sm:$0xff]
        %v337 = vld [vmem:[%s5 + $0x78] sm:$0xff]
        %vm340 = vcmask 1041409
        %v341 = vsel %vm340, %v321, %v315
        %343 = vmatprep.subr.mxu0 0.0
        %344 = vmatpush1.msra.mxu0 %v322
        %345 = vmatprep.subr.mxu0 0.0
        %346 = vmatpush1.msra.mxu0 %v323
        %347 = vmatprep.subr.mxu0 0.0
        %348 = vmatpush1.msra.mxu0 %v324
        %349 = vmatprep.subr.mxu0 0.0
        %350 = vmatpush1.msra.mxu0 %v325
        %351 = vmatprep.subr.mxu0 0.0
        %352 = vmatpush1.msra.mxu0 %v326
        %353 = vmatprep.subr.mxu0 0.0
        %354 = vmatpush1.msra.mxu0 %v327
        %355 = vmatprep.subr.mxu0 0.0
        %356 = vmatpush1.msra.mxu0 %v328
        %357 = vmatprep.subr.mxu0 0.0
        %358 = vmatpush1.msra.mxu0 %v329
        %359 = vmatprep.subr.mxu0 0.0
        %360 = vmatpush1.msra.mxu0 %v330
        %361 = vmatprep.subr.mxu0 0.0
        %362 = vmatpush1.msra.mxu0 %v331
        %363 = vmatprep.subr.mxu0 0.0
        %364 = vmatpush1.msra.mxu0 %v332
        %365 = vmatprep.subr.mxu0 0.0
        %366 = vmatpush1.msra.mxu0 %v333
        %367 = vmatprep.subr.mxu0 0.0
        %368 = vmatpush1.msra.mxu0 %v334
        %369 = vmatprep.subr.mxu0 0.0
        %370 = vmatpush1.msra.mxu0 %v335
        %371 = vmatprep.subr.mxu0 0.0
        %372 = vmatpush1.msra.mxu0 %v336
        %373 = vmatprep.subr.mxu0 0.0
        %374 = vmatpush1.msra.mxu0 %v337
        %375 = vmatprep.subr.mxu0 0.0
        %376 = vmatpush1.msra.mxu0 0.0
        %377 = vmatprep.subr.mxu0 0.0
        %378 = vmatpush1.msra.mxu0 0.0
        %379 = vmatprep.subr.mxu0 0.0
        %380 = vmatpush1.msra.mxu0 0.0
        %381 = vmatprep.subr.mxu0 0.0
        %382 = vmatpush1.msra.mxu0 0.0
        %383 = vmatprep.subr.mxu0 0.0
        %384 = vmatpush1.msra.mxu0 0.0
        %385 = vmatprep.subr.mxu0 0.0
        %386 = vmatpush1.msra.mxu0 0.0
        %387 = vmatprep.subr.mxu0 0.0
        %388 = vmatpush1.msra.mxu0 0.0
        %389 = vmatprep.subr.mxu0 0.0
        %390 = vmatpush1.msra.mxu0 0.0
        %391 = vmatprep.subr.mxu0 0.0
        %392 = vmatpush1.msra.mxu0 0.0
        %393 = vmatprep.subr.mxu0 0.0
        %394 = vmatpush1.msra.mxu0 0.0
        %395 = vmatprep.subr.mxu0 0.0
        %396 = vmatpush1.msra.mxu0 0.0
        %397 = vmatprep.subr.mxu0 0.0
        %398 = vmatpush1.msra.mxu0 0.0
        %399 = vmatprep.subr.mxu0 0.0
        %400 = vmatpush1.msra.mxu0 0.0
        %401 = vmatprep.subr.mxu0 0.0
        %402 = vmatpush1.msra.mxu0 0.0
        %403 = vmatprep.subr.mxu0 0.0
        %404 = vmatpush1.msra.mxu0 0.0
        %405 = vmatprep.subr.mxu0 0.0
        %406 = vmatpush1.msra.mxu0 0.0
        %407 = vmatprep.mubr.f32.mxu0 0.0
        %408 = vmatmul.mubr.f32.gmra.mrb[0].mxu0 %v341
        %v409 = vpop.f32.mrb[0].mxu0
        %v410 = vadd.f32 0.0, %v409
        %v411 = vpop.f32.mrb[0].mxu0
        %412 = vdwg.mxu0
        %v413 = vld [vmem:[%s1] sm:$0xff]
        %v414 = vld [vmem:[%s1 + $0x8] sm:$0xff]
        %v415 = vld [vmem:[%s2] sm:$0x1]
        %v417 = vlaneseq
        %v418 = vshrl.u32 %v417, 7
        %v419 = vsub.s32 0, %v418
        %v420 = vrot.slane %v415, %v419
        %vm422 = vcmask 130048
        %v424 = vsel %vm422, %v410, 0
        %426 = vmatprep.subr.mxu0 0.0
        %427 = vmatpush1.msra.mxu0 %v413
        %428 = vmatprep.subr.mxu0 0.0
        %429 = vmatpush1.msra.mxu0 %v414
        %430 = vmatprep.subr.mxu0 0.0
        %431 = vmatpush1.msra.mxu0 0.0
        %432 = vmatprep.subr.mxu0 0.0
        %433 = vmatpush1.msra.mxu0 0.0
        %434 = vmatprep.subr.mxu0 0.0
        %435 = vmatpush1.msra.mxu0 0.0
        %436 = vmatprep.subr.mxu0 0.0
        %437 = vmatpush1.msra.mxu0 0.0
        %438 = vmatprep.subr.mxu0 0.0
        %439 = vmatpush1.msra.mxu0 0.0
        %440 = vmatprep.subr.mxu0 0.0
        %441 = vmatpush1.msra.mxu0 0.0
        %442 = vmatprep.subr.mxu0 0.0
        %443 = vmatpush1.msra.mxu0 0.0
        %444 = vmatprep.subr.mxu0 0.0
        %445 = vmatpush1.msra.mxu0 0.0
        %446 = vmatprep.subr.mxu0 0.0
        %447 = vmatpush1.msra.mxu0 0.0
        %448 = vmatprep.subr.mxu0 0.0
        %449 = vmatpush1.msra.mxu0 0.0
        %450 = vmatprep.subr.mxu0 0.0
        %451 = vmatpush1.msra.mxu0 0.0
        %452 = vmatprep.subr.mxu0 0.0
        %453 = vmatpush1.msra.mxu0 0.0
        %454 = vmatprep.subr.mxu0 0.0
        %455 = vmatpush1.msra.mxu0 0.0
        %456 = vmatprep.subr.mxu0 0.0
        %457 = vmatpush1.msra.mxu0 0.0
        %458 = vmatprep.subr.mxu0 0.0
        %459 = vmatpush1.msra.mxu0 0.0
        %460 = vmatprep.subr.mxu0 0.0
        %461 = vmatpush1.msra.mxu0 0.0
        %462 = vmatprep.subr.mxu0 0.0
        %463 = vmatpush1.msra.mxu0 0.0
        %464 = vmatprep.subr.mxu0 0.0
        %465 = vmatpush1.msra.mxu0 0.0
        %466 = vmatprep.subr.mxu0 0.0
        %467 = vmatpush1.msra.mxu0 0.0
        %468 = vmatprep.subr.mxu0 0.0
        %469 = vmatpush1.msra.mxu0 0.0
        %470 = vmatprep.subr.mxu0 0.0
        %471 = vmatpush1.msra.mxu0 0.0
        %472 = vmatprep.subr.mxu0 0.0
        %473 = vmatpush1.msra.mxu0 0.0
        %474 = vmatprep.subr.mxu0 0.0
        %475 = vmatpush1.msra.mxu0 0.0
        %476 = vmatprep.subr.mxu0 0.0
        %477 = vmatpush1.msra.mxu0 0.0
        %478 = vmatprep.subr.mxu0 0.0
        %479 = vmatpush1.msra.mxu0 0.0
        %480 = vmatprep.subr.mxu0 0.0
        %481 = vmatpush1.msra.mxu0 0.0
        %482 = vmatprep.subr.mxu0 0.0
        %483 = vmatpush1.msra.mxu0 0.0
        %484 = vmatprep.subr.mxu0 0.0
        %485 = vmatpush1.msra.mxu0 0.0
        %486 = vmatprep.subr.mxu0 0.0
        %487 = vmatpush1.msra.mxu0 0.0
        %488 = vmatprep.subr.mxu0 0.0
        %489 = vmatpush1.msra.mxu0 0.0
        %490 = vmatprep.mubr.f32.mxu0 0.0
        %491 = vmatmul.mubr.f32.gmra.mrb[0].mxu0 %v424
        %v492 = vpop.f32.mrb[0].mxu0
        %v493 = vadd.f32 %v420, %v492
        %v494 = vpop.f32.mrb[0].mxu0
        %495 = vdwg.mxu0
        %v496 = vmax.f32 %v493, 0.0
        %v497 = vld [vmem:[%s3] sm:$0xf]
        %v498 = vld [vmem:[%s4] sm:$0x1]
        %v500 = vlaneseq
        %v501 = vshrl.u32 %v500, 7
        %v502 = vsub.s32 0, %v501
        %v503 = vrot.slane %v498, %v502
        %vm505 = vcmask 31744
        %v507 = vsel %vm505, %v496, 0
        %vm509 = vcmask 1043456
        %v511 = vsel %vm509, %v497, 0
        %513 = vmatprep.subr.mxu0 0.0
        %514 = vmatpush1.msra.mxu0 %v511
        %515 = vmatprep.subr.mxu0 0.0
        %516 = vmatpush1.msra.mxu0 0.0
        %517 = vmatprep.subr.mxu0 0.0
        %518 = vmatpush1.msra.mxu0 0.0
        %519 = vmatprep.subr.mxu0 0.0
        %520 = vmatpush1.msra.mxu0 0.0
        %521 = vmatprep.subr.mxu0 0.0
        %522 = vmatpush1.msra.mxu0 0.0
        %523 = vmatprep.subr.mxu0 0.0
        %524 = vmatpush1.msra.mxu0 0.0
        %525 = vmatprep.subr.mxu0 0.0
        %526 = vmatpush1.msra.mxu0 0.0
        %527 = vmatprep.subr.mxu0 0.0
        %528 = vmatpush1.msra.mxu0 0.0
        %529 = vmatprep.subr.mxu0 0.0
        %530 = vmatpush1.msra.mxu0 0.0
        %531 = vmatprep.subr.mxu0 0.0
        %532 = vmatpush1.msra.mxu0 0.0
        %533 = vmatprep.subr.mxu0 0.0
        %534 = vmatpush1.msra.mxu0 0.0
        %535 = vmatprep.subr.mxu0 0.0
        %536 = vmatpush1.msra.mxu0 0.0
        %537 = vmatprep.subr.mxu0 0.0
        %538 = vmatpush1.msra.mxu0 0.0
        %539 = vmatprep.subr.mxu0 0.0
        %540 = vmatpush1.msra.mxu0 0.0
        %541 = vmatprep.subr.mxu0 0.0
        %542 = vmatpush1.msra.mxu0 0.0
        %543 = vmatprep.subr.mxu0 0.0
        %544 = vmatpush1.msra.mxu0 0.0
        %545 = vmatprep.subr.mxu0 0.0
        %546 = vmatpush1.msra.mxu0 0.0
        %547 = vmatprep.subr.mxu0 0.0
        %548 = vmatpush1.msra.mxu0 0.0
        %549 = vmatprep.subr.mxu0 0.0
        %550 = vmatpush1.msra.mxu0 0.0
        %551 = vmatprep.subr.mxu0 0.0
        %552 = vmatpush1.msra.mxu0 0.0
        %553 = vmatprep.subr.mxu0 0.0
        %554 = vmatpush1.msra.mxu0 0.0
        %555 = vmatprep.subr.mxu0 0.0
        %556 = vmatpush1.msra.mxu0 0.0
        %557 = vmatprep.subr.mxu0 0.0
        %558 = vmatpush1.msra.mxu0 0.0
        %559 = vmatprep.subr.mxu0 0.0
        %560 = vmatpush1.msra.mxu0 0.0
        %561 = vmatprep.subr.mxu0 0.0
        %562 = vmatpush1.msra.mxu0 0.0
        %563 = vmatprep.subr.mxu0 0.0
        %564 = vmatpush1.msra.mxu0 0.0
        %565 = vmatprep.subr.mxu0 0.0
        %566 = vmatpush1.msra.mxu0 0.0
        %567 = vmatprep.subr.mxu0 0.0
        %568 = vmatpush1.msra.mxu0 0.0
        %569 = vmatprep.subr.mxu0 0.0
        %570 = vmatpush1.msra.mxu0 0.0
        %571 = vmatprep.subr.mxu0 0.0
        %572 = vmatpush1.msra.mxu0 0.0
        %573 = vmatprep.subr.mxu0 0.0
        %574 = vmatpush1.msra.mxu0 0.0
        %575 = vmatprep.subr.mxu0 0.0
        %576 = vmatpush1.msra.mxu0 0.0
        %577 = vmatprep.mubr.f32.mxu0 0.0
        %578 = vmatmul.mubr.f32.gmra.mrb[0].mxu0 %v507
        %v579 = vpop.f32.mrb[0].mxu0
        %v580 = vadd.f32 %v503, %v579
        %v581 = vpop.f32.mrb[0].mxu0
        %582 = vdwg.mxu0
        %v583 = vadd.f32 %v580, 3.0
        %v584 = vmax.f32 %v583, 0.0
        %v585 = vmin.f32 %v584, 6.0
        %v586 = vmul.f32 %v585, 0.16666667
        %v587 = vld [vmem:[%s6] sm:$0xff]
        %v588 = vld [vmem:[%s6 + $0x8] sm:$0xff]
        %v590 = vsel %vm422, %v586, 0
        %592 = vmatprep.subr.mxu0 0.0
        %593 = vmatpush1.msra.mxu0 %v587
        %594 = vmatprep.subr.mxu0 0.0
        %595 = vmatpush1.msra.mxu0 %v588
        %596 = vmatprep.subr.mxu0 0.0
        %597 = vmatpush1.msra.mxu0 0.0
        %598 = vmatprep.subr.mxu0 0.0
        %599 = vmatpush1.msra.mxu0 0.0
        %600 = vmatprep.subr.mxu0 0.0
        %601 = vmatpush1.msra.mxu0 0.0
        %602 = vmatprep.subr.mxu0 0.0
        %603 = vmatpush1.msra.mxu0 0.0
        %604 = vmatprep.subr.mxu0 0.0
        %605 = vmatpush1.msra.mxu0 0.0
        %606 = vmatprep.subr.mxu0 0.0
        %607 = vmatpush1.msra.mxu0 0.0
        %608 = vmatprep.subr.mxu0 0.0
        %609 = vmatpush1.msra.mxu0 0.0
        %610 = vmatprep.subr.mxu0 0.0
        %611 = vmatpush1.msra.mxu0 0.0
        %612 = vmatprep.subr.mxu0 0.0
        %613 = vmatpush1.msra.mxu0 0.0
        %614 = vmatprep.subr.mxu0 0.0
        %615 = vmatpush1.msra.mxu0 0.0
        %616 = vmatprep.subr.mxu0 0.0
        %617 = vmatpush1.msra.mxu0 0.0
        %618 = vmatprep.subr.mxu0 0.0
        %619 = vmatpush1.msra.mxu0 0.0
        %620 = vmatprep.subr.mxu0 0.0
        %621 = vmatpush1.msra.mxu0 0.0
        %622 = vmatprep.subr.mxu0 0.0
        %623 = vmatpush1.msra.mxu0 0.0
        %624 = vmatprep.subr.mxu0 0.0
        %625 = vmatpush1.msra.mxu0 0.0
        %626 = vmatprep.subr.mxu0 0.0
        %627 = vmatpush1.msra.mxu0 0.0
        %628 = vmatprep.subr.mxu0 0.0
        %629 = vmatpush1.msra.mxu0 0.0
        %630 = vmatprep.subr.mxu0 0.0
        %631 = vmatpush1.msra.mxu0 0.0
        %632 = vmatprep.subr.mxu0 0.0
        %633 = vmatpush1.msra.mxu0 0.0
        %634 = vmatprep.subr.mxu0 0.0
        %635 = vmatpush1.msra.mxu0 0.0
        %636 = vmatprep.subr.mxu0 0.0
        %637 = vmatpush1.msra.mxu0 0.0
        %638 = vmatprep.subr.mxu0 0.0
        %639 = vmatpush1.msra.mxu0 0.0
        %640 = vmatprep.subr.mxu0 0.0
        %641 = vmatpush1.msra.mxu0 0.0
        %642 = vmatprep.subr.mxu0 0.0
        %643 = vmatpush1.msra.mxu0 0.0
        %644 = vmatprep.subr.mxu0 0.0
        %645 = vmatpush1.msra.mxu0 0.0
        %646 = vmatprep.subr.mxu0 0.0
        %647 = vmatpush1.msra.mxu0 0.0
        %648 = vmatprep.subr.mxu0 0.0
        %649 = vmatpush1.msra.mxu0 0.0
        %650 = vmatprep.subr.mxu0 0.0
        %651 = vmatpush1.msra.mxu0 0.0
        %652 = vmatprep.subr.mxu0 0.0
        %653 = vmatpush1.msra.mxu0 0.0
        %654 = vmatprep.subr.mxu0 0.0
        %655 = vmatpush1.msra.mxu0 0.0
        %656 = vmatprep.mubr.f32.mxu0 0.0
        %657 = vmatmul.mubr.f32.gmra.mrb[0].mxu0 %v590
        %v658 = vpop.f32.mrb[0].mxu0
        %v659 = vadd.f32 0.0, %v658
        %v660 = vpop.f32.mrb[0].mxu0
        %661 = vdwg.mxu0
        %v664 = vunpack.c.l.s4 1966171168
        %v665 = vunpack.c.0.s8 %v664
        %v666 = vlaneseq
        %v667 = vshrl.u32 %v666, 7
        %v668 = vsub.s32 %v665, %v667
        %v669 = vrot.slane %v659, %v668
        %v670 = vcombine.high %v669, %v669
        %v672 = vunpack.c.l.s4 1966171168
        %v673 = vunpack.c.0.s8 %v672
        %v674 = vlaneseq
        %v675 = vshrl.u32 %v674, 7
        %v676 = vsub.s32 %v673, %v675
        %v677 = vrot.slane %v669, %v676
        %v679 = vunpack.c.l.s4 1966171168
        %v680 = vunpack.c.0.s8 %v679
        %v681 = vlaneseq
        %v682 = vshrl.u32 %v681, 7
        %v683 = vsub.s32 %v680, %v682
        %v684 = vrot.slane %v670, %v683
        %v685 = vlaneseq
        %v686 = vshrl.u32 %v685, 7
        %v687 = vsub.s32 0, %v686
        %v688 = vrot.slane %v677, %v687
        %v689 = vlaneseq
        %v690 = vshrl.u32 %v689, 7
        %v691 = vsub.s32 0, %v690
        %v692 = vrot.slane %v684, %v691
        %v695 = vmul.f32 %v308, %v688
        %v696 = vmul.f32 %v309, %v692
        %697 = vst [vmem:[%s296] sm:$0xff] %v695
        %698 = vst [vmem:[%s296 + $0x8] sm:$0xff] %v696
        %s699 = sand.u32 %s197, 1
        %s700 = scalar_lea.sflag [#allocation3], %s699
        %s701 = sand.u32 %s197, 1
        %s702 = smul.addr %s701, 16
        %s703 = scalar_lea.vmem [#allocation2], %s702
        // Predicated region
        $region49: #{tpu_custom_call.1} parent=47 // pred_check
          %p704 = pneg %p207
        $region50: #{tpu_custom_call.1} parent=47 // pred_check_branch
          %706 = sbr.rel (%p704) target = $region52
        $region51: #{tpu_custom_call.1} parent=47 // pred_region
          %s707 = smul.u32 2, %s26
          %s709 = ssub.s32 256, 256
          %710 = vsyncadd %s700, %s709
          %s711 = smul.addr %s25, 8
          %s712 = sadd.s32 %s707, %s711
          %s713 = smul.addr %s712, 128
          %s714 = scalar_lea.hbm %s7, %s713
          %s715 = sshll.u32 %s703, 4
          %s716 = int_to_ptr.vmem [resolvable:$true] %s715
          %721 = dma.vmem_to_hbm [thread:$0]  %s716, 256, %s714, %s700, 128, 128, 8
        $region52: #{tpu_custom_call.1} parent=47 // pred_fallthru
          _
      $region48: #{tpu_custom_call.1} parent=5 // pred_fallthru
        _
      %p722 = scmp.le.s32.totalorder 2, %s16
      // Predicated region
      $region53: #{tpu_custom_call.1} parent=5 // pred_check
        %p723 = pneg %p722
      $region54: #{tpu_custom_call.1} parent=5 // pred_check_branch
        %725 = sbr.rel (%p723) target = $region56
      $region55: #{tpu_custom_call.1} parent=5 // pred_region
        %s726 = ssub.s32 %s16, 2
        // Predicated region
        $region57: #{tpu_custom_call.1} parent=55 // pred_check
          %p727 = pneg %p213
        $region58: #{tpu_custom_call.1} parent=55 // pred_check_branch
          %729 = sbr.rel (%p727) target = $region60
        $region59: #{tpu_custom_call.1} parent=55 // pred_region
          %s730 = sand.u32 %s198, 1
          %s731 = scalar_lea.sflag [#allocation3], %s730
          %s732 = sand.u32 %s198, 1
          %s733 = smul.addr %s732, 16
          %s734 = scalar_lea.vmem [#allocation2], %s733
          %735 = dma.done %s731, 256
        $region60: #{tpu_custom_call.1} parent=55 // pred_fallthru
          _
      $region56: #{tpu_custom_call.1} parent=5 // pred_fallthru
        _
    $region6: #{tpu_custom_call.1} parent=1 // loop_footer
      %s20 = sadd.s32 1, %s16
    $region7: #{tpu_custom_call.1} parent=1 // loop_footer_branch
      %15 = sbr.rel target = $region3
    $region8: #{tpu_custom_call.1} parent=1 // loop_exit
      _
    %736 = vsyncpa [#allocation3], 1
    %s737 = scalar_lea.sflag [#allocation3], 1
    %738 = vsyncpa %s737, 1

</llo_original>
